<compile_context>
chip_gen: v5e
topology: v5e:2x2
jax: 0.10.0
libtpu: 0.0.40
codegen_flags: <defaults>
</compile_context>

<pallas_src>
import jax
import jax.numpy as jnp
import numpy as np
from jax.experimental import pallas as pl
from jax.experimental.pallas import tpu as pltpu


def _render_kernel(raw_ref, pts_ref, rgb_ref, w_ref):
    # raw_ref: (C, S, BR)   pts_ref: (3, S, BR)
    # rgb_ref: (C, BR)      w_ref:   (S, BR)
    C, S, BR = raw_ref.shape
    f32 = jnp.float32

    # Cyclic "next sample" shift along S (sublane axis): x[s] -> x[(s+1) % S].
    def next_s(a2d):
        return pltpu.roll(a2d, shift=S - 1, axis=0)

    # ---- distances: stream pts one channel at a time (bounded live vregs) ----
    p = pts_ref[0].astype(f32)
    d = next_s(p) - p
    sq = d * d
    p = pts_ref[1].astype(f32)
    d = next_s(p) - p
    sq = sq + d * d
    p = pts_ref[2].astype(f32)
    d = next_s(p) - p
    sq = sq + d * d
    dists = jnp.sqrt(sq)                                        # (S, BR)

    s_idx = jax.lax.broadcasted_iota(jnp.int32, (S, BR), 0)
    valid = s_idx < (S - 1)
    d_valid = jnp.where(valid, dists, 0.0)                      # d[S-1] := 0
    d_prev = pltpu.roll(d_valid, shift=1, axis=0)               # d[s-1]; d[-1] = 0
    coef = 0.5 * (d_valid + d_prev)                             # rgb coefficient
    dists_full = jnp.where(valid, d_valid, d_prev)              # last row = d[S-2]
    # Only `coef` and `dists_full` stay live past this point.

    # ---- per-channel streaming: rgb rows + running channel sum ---------------
    raw_sum = None
    for c in range(C):
        rc = raw_ref[c].astype(f32)                             # (S, BR)
        rgb_ref[pl.ds(c, 1), :] = jnp.sum(
            rc * coef, axis=0, keepdims=True).astype(rgb_ref.dtype)
        raw_sum = rc if raw_sum is None else raw_sum + rc

    # weights = 1 - exp(-relu(mean_c raw) * dists_full)
    w_pre = jnp.maximum(raw_sum * (1.0 / C), 0.0)
    w_ref[...] = (1.0 - jnp.exp(-w_pre * dists_full)).astype(w_ref.dtype)


def _vmem_capacity():
    try:
        return int(pltpu.get_tpu_info().vmem_capacity_bytes)
    except Exception:
        return 64 << 20  # conservative fallback (v7x per-TensorCore VMEM)


def _auto_block_rays(C, S, R, in_itemsize, out_itemsize):
    """Ray-tile size: lane-dense, VMEM- and vreg-aware, >=2 grid steps for v7x."""
    if R <= 128:
        return R                                   # single full block
    r_ceil = ((R + 127) // 128) * 128

    # Double-buffered input + output blocks must stay well inside scoped VMEM.
    vmem_cap = _vmem_capacity()
    block_budget = int(vmem_cap * 0.45)
    bytes_per_ray = 2 * ((C + 3) * S * in_itemsize + (C + S) * out_itemsize)
    br = 8192
    while br > 128 and br * bytes_per_ray > block_budget:
        br //= 2

    # Register-pressure soft cap: ~4 live (S, br) f32 slabs <= ~4x the vreg file,
    # so any spill traffic stays tiny relative to the HBM DMA per block.
    reg_cap = max(128, ((1 << 20) // max(1, 4 * S * 4)) // 128 * 128)
    br = min(br, reg_cap)

    # Megacore (v7x has 2 TensorCores): keep >=2 grid steps, ideally >=4.
    if R >= 4 * 1024:
        br = min(br, max(128, (R // 4) // 128 * 128))
    elif R >= 256:
        br = min(br, max(128, (R // 2) // 128 * 128))

    return min(br, r_ceil)


def projection_render_lane_major(raw_csr, pts_csr, *, block_rays=None,
                                 out_dtype=jnp.float32, input_buffer_count=None):
    """Lane-major ProjectionRenderer: no wrapper transposes, no padding.

    Args:
      raw_csr: [C, S, R] prediction (rays on the lane axis).
      pts_csr: [3, S, R] sampled points.
      block_rays: optional ray-tile size (multiple of 128). Auto-sized if None.
      out_dtype: dtype of outputs (bf16 halves writeback if downstream allows).
      input_buffer_count: e.g. 3 on v5e if xprof shows exposed DMA (default 2).
    Returns:
      dict(rgb=[C, R], weights=[S, R]) in out_dtype.
    """
    C, S, R = raw_csr.shape
    assert pts_csr.shape == (3, S, R)
    assert S >= 2

    in_itemsize = raw_csr.dtype.itemsize
    out_itemsize = np.dtype(out_dtype).itemsize
    if block_rays is None:
        block_rays = _auto_block_rays(C, S, R, in_itemsize, out_itemsize)

    grid = (pl.cdiv(R, block_rays),)

    block_bytes = 2 * block_rays * ((C + 3) * S * in_itemsize
                                    + (C + S) * out_itemsize)
    vmem_cap = _vmem_capacity()
    vmem_limit = int(min(max(block_bytes + (8 << 20), 32 << 20),
                         int(vmem_cap * 0.85)))

    def _in_spec(shape, imap):
        if input_buffer_count is not None and input_buffer_count != 2:
            return pl.BlockSpec(shape, imap,
                                pipeline_mode=pl.Buffered(input_buffer_count))
        return pl.BlockSpec(shape, imap)

    rgb, weights = pl.pallas_call(
        _render_kernel,
        out_shape=(
            jax.ShapeDtypeStruct((C, R), out_dtype),
            jax.ShapeDtypeStruct((S, R), out_dtype),
        ),
        grid_spec=pltpu.PrefetchScalarGridSpec(
            num_scalar_prefetch=0,
            grid=grid,
            in_specs=[
                _in_spec((C, S, block_rays), lambda i: (0, 0, i)),
                _in_spec((3, S, block_rays), lambda i: (0, 0, i)),
            ],
            out_specs=[
                pl.BlockSpec((C, block_rays), lambda i: (0, i)),
                pl.BlockSpec((S, block_rays), lambda i: (0, i)),
            ],
        ),
        compiler_params=pltpu.CompilerParams(
            dimension_semantics=("parallel",),
            vmem_limit_bytes=vmem_limit,
        ),
    )(raw_csr, pts_csr)
    return dict(rgb=rgb, weights=weights)


def projection_render(raw, pts, *, block_rays=None, out_dtype=jnp.float32,
                      input_buffer_count=None):
    """Module-compatible wrapper: raw [R,S,C], pts [R,S,3] -> rgb [R,C], w [R,S].

    NOTE: the input/output transposes here cost ~2 extra full HBM passes on this
    bandwidth-bound op; in a real pipeline the producer should emit [C,S,R] /
    [3,S,R] and the consumer should take [C,R] / [S,R] directly via
    projection_render_lane_major().
    """
    R, S, C = raw.shape
    assert pts.shape == (R, S, 3)
    raw_csr = jnp.transpose(raw, (2, 1, 0))       # (C, S, R)
    pts_csr = jnp.transpose(pts, (2, 1, 0))       # (3, S, R)
    out = projection_render_lane_major(
        raw_csr, pts_csr, block_rays=block_rays, out_dtype=out_dtype,
        input_buffer_count=input_buffer_count)
    return dict(rgb=out["rgb"].T, weights=out["weights"].T)


def _reference(raw, pts):
    # Plain-JAX reference mirroring the PyTorch module (sanity check).
    dists = jnp.linalg.norm(pts[..., 1:, :] - pts[..., :-1, :], axis=-1)
    values = (raw[..., :-1, :] + raw[..., 1:, :]) / 2.0
    rgb = jnp.sum(values * dists[..., None], axis=-2)
    w = jnp.mean(raw, axis=-1)
    dists_full = jnp.concatenate([dists, dists[..., -1:]], axis=-1)
    weights = 1.0 - jnp.exp(-jax.nn.relu(w) * dists_full)
    return dict(rgb=rgb, weights=weights)


if __name__ == "__main__":
    key = jax.random.PRNGKey(0)
    k1, k2, k3, k4 = jax.random.split(key, 4)

    num_samples, C = 16, 4

    # Case 1: R multiple of 128 -> grid of 2 "parallel" steps (v7x megacore).
    R1 = 256
    raw1 = jax.random.normal(k1, (R1, num_samples, C), dtype=jnp.float32)
    pts1 = jax.random.normal(k2, (R1, num_samples, 3), dtype=jnp.float32)
    out1 = projection_render(raw1, pts1)
    jax.block_until_ready(out1)
    ref1 = _reference(raw1, pts1)
    assert out1["rgb"].shape == (R1, C)
    assert out1["weights"].shape == (R1, num_samples)
    assert jnp.allclose(out1["rgb"], ref1["rgb"], atol=1e-4, rtol=1e-4)
    assert jnp.allclose(out1["weights"], ref1["weights"], atol=1e-4, rtol=1e-4)

    # Case 2: ragged R (not a multiple of 128) -> partial block, no jnp.pad.
    R2 = 200
    raw2 = jax.random.normal(k3, (R2, num_samples, C), dtype=jnp.float32)
    pts2 = jax.random.normal(k4, (R2, num_samples, 3), dtype=jnp.float32)
    out2 = projection_render(raw2, pts2)
    jax.block_until_ready(out2)
    ref2 = _reference(raw2, pts2)
    assert out2["rgb"].shape == (R2, C)
    assert out2["weights"].shape == (R2, num_samples)
    assert jnp.allclose(out2["rgb"], ref2["rgb"], atol=1e-4, rtol=1e-4)
    assert jnp.allclose(out2["weights"], ref2["weights"], atol=1e-4, rtol=1e-4)

    # raw_noise_std is unused in the reference forward pass, so nothing to add.
    print("KERNEL_OK")
</pallas_src>

<mosaic_0001>
module attributes {stable_mosaic.version = 11 : i64} {
  func.func @_render_kernel(%arg0: i32, %arg1: memref<4x16x128xf32, #tpu.memory_space<vmem>>, %arg2: memref<3x16x128xf32, #tpu.memory_space<vmem>>, %arg3: memref<4x128xf32, #tpu.memory_space<vmem>>, %arg4: memref<16x128xf32, #tpu.memory_space<vmem>>) attributes {dimension_semantics = [#tpu.dimension_semantics<parallel>], iteration_bounds = array<i64: 2>, scalar_prefetch = 0 : i64, scratch_operands = 0 : i64, tpu.core_type = #tpu.core_type<tc>, window_params = [{transform_indices = @transform_0, window_bounds = array<i64: 4, 16, 128>}, {transform_indices = @transform_1, window_bounds = array<i64: 3, 16, 128>}, {transform_indices = @transform_2, window_bounds = array<i64: 4, 128>}, {transform_indices = @transform_3, window_bounds = array<i64: 16, 128>}]} {
    %c0 = arith.constant 0 : index
    %c0_0 = arith.constant 0 : index
    %c0_1 = arith.constant 0 : index
    %0 = vector.load %arg2[%c0, %c0_0, %c0_1] : memref<3x16x128xf32, #tpu.memory_space<vmem>>, vector<1x16x128xf32>
    %1 = vector.shape_cast %0 : vector<1x16x128xf32> to vector<16x128xf32>
    %c15_i32 = arith.constant 15 : i32
    %2 = tpu.dynamic_rotate %1 by %c15_i32 dim 0 : vector<16x128xf32>, i32 -> vector<16x128xf32>
    %3 = arith.subf %2, %1 : vector<16x128xf32>
    %4 = arith.mulf %3, %3 : vector<16x128xf32>
    %c1 = arith.constant 1 : index
    %c0_2 = arith.constant 0 : index
    %c0_3 = arith.constant 0 : index
    %5 = vector.load %arg2[%c1, %c0_2, %c0_3] : memref<3x16x128xf32, #tpu.memory_space<vmem>>, vector<1x16x128xf32>
    %6 = vector.shape_cast %5 : vector<1x16x128xf32> to vector<16x128xf32>
    %c15_i32_4 = arith.constant 15 : i32
    %7 = tpu.dynamic_rotate %6 by %c15_i32_4 dim 0 : vector<16x128xf32>, i32 -> vector<16x128xf32>
    %8 = arith.subf %7, %6 : vector<16x128xf32>
    %9 = arith.mulf %8, %8 : vector<16x128xf32>
    %10 = arith.addf %4, %9 : vector<16x128xf32>
    %c2 = arith.constant 2 : index
    %c0_5 = arith.constant 0 : index
    %c0_6 = arith.constant 0 : index
    %11 = vector.load %arg2[%c2, %c0_5, %c0_6] : memref<3x16x128xf32, #tpu.memory_space<vmem>>, vector<1x16x128xf32>
    %12 = vector.shape_cast %11 : vector<1x16x128xf32> to vector<16x128xf32>
    %c15_i32_7 = arith.constant 15 : i32
    %13 = tpu.dynamic_rotate %12 by %c15_i32_7 dim 0 : vector<16x128xf32>, i32 -> vector<16x128xf32>
    %14 = arith.subf %13, %12 : vector<16x128xf32>
    %15 = arith.mulf %14, %14 : vector<16x128xf32>
    %16 = arith.addf %10, %15 : vector<16x128xf32>
    %17 = math.sqrt %16 : vector<16x128xf32>
    %18 = tpu.iota {dimensions = array<i32: 0>} : vector<16x128xi32>
    %c15_i32_8 = arith.constant 15 : i32
    %19 = vector.broadcast %c15_i32_8 : i32 to vector<16x128xi32>
    %20 = arith.cmpi slt, %18, %19 : vector<16x128xi32>
    %cst = arith.constant 0.000000e+00 : f32
    %21 = vector.broadcast %cst : f32 to vector<16x128xf32>
    %22 = arith.select %20, %17, %21 : vector<16x128xi1>, vector<16x128xf32>
    %c1_i32 = arith.constant 1 : i32
    %23 = tpu.dynamic_rotate %22 by %c1_i32 dim 0 : vector<16x128xf32>, i32 -> vector<16x128xf32>
    %24 = arith.addf %22, %23 : vector<16x128xf32>
    %cst_9 = arith.constant 5.000000e-01 : f32
    %25 = vector.broadcast %cst_9 : f32 to vector<16x128xf32>
    %26 = arith.mulf %25, %24 : vector<16x128xf32>
    %27 = arith.select %20, %22, %23 : vector<16x128xi1>, vector<16x128xf32>
    %c0_10 = arith.constant 0 : index
    %c0_11 = arith.constant 0 : index
    %c0_12 = arith.constant 0 : index
    %28 = vector.load %arg1[%c0_10, %c0_11, %c0_12] : memref<4x16x128xf32, #tpu.memory_space<vmem>>, vector<1x16x128xf32>
    %29 = vector.shape_cast %28 : vector<1x16x128xf32> to vector<16x128xf32>
    %30 = arith.mulf %29, %26 : vector<16x128xf32>
    %cst_13 = arith.constant dense<0.000000e+00> : vector<128xf32>
    %31 = vector.multi_reduction <add>, %30, %cst_13 [0] : vector<16x128xf32> to vector<128xf32>
    %32 = vector.shape_cast %31 : vector<128xf32> to vector<1x128xf32>
    %c0_14 = arith.constant 0 : index
    %c0_15 = arith.constant 0 : index
    %33 = vector.load %arg3[%c0_14, %c0_15] : memref<4x128xf32, #tpu.memory_space<vmem>>, vector<1x128xf32>
    tpu.vector_store %arg3[%c0_14, %c0_15], %32 {strides = array<i32>} : memref<4x128xf32, #tpu.memory_space<vmem>>, vector<1x128xf32>,
    %c1_16 = arith.constant 1 : index
    %c0_17 = arith.constant 0 : index
    %c0_18 = arith.constant 0 : index
    %34 = vector.load %arg1[%c1_16, %c0_17, %c0_18] : memref<4x16x128xf32, #tpu.memory_space<vmem>>, vector<1x16x128xf32>
    %35 = vector.shape_cast %34 : vector<1x16x128xf32> to vector<16x128xf32>
    %36 = arith.mulf %35, %26 : vector<16x128xf32>
    %cst_19 = arith.constant dense<0.000000e+00> : vector<128xf32>
    %37 = vector.multi_reduction <add>, %36, %cst_19 [0] : vector<16x128xf32> to vector<128xf32>
    %38 = vector.shape_cast %37 : vector<128xf32> to vector<1x128xf32>
    %c1_20 = arith.constant 1 : index
    %c0_21 = arith.constant 0 : index
    %39 = vector.load %arg3[%c1_20, %c0_21] : memref<4x128xf32, #tpu.memory_space<vmem>>, vector<1x128xf32>
    tpu.vector_store %arg3[%c1_20, %c0_21], %38 {strides = array<i32>} : memref<4x128xf32, #tpu.memory_space<vmem>>, vector<1x128xf32>,
    %40 = arith.addf %29, %35 : vector<16x128xf32>
    %c2_22 = arith.constant 2 : index
    %c0_23 = arith.constant 0 : index
    %c0_24 = arith.constant 0 : index
    %41 = vector.load %arg1[%c2_22, %c0_23, %c0_24] : memref<4x16x128xf32, #tpu.memory_space<vmem>>, vector<1x16x128xf32>
    %42 = vector.shape_cast %41 : vector<1x16x128xf32> to vector<16x128xf32>
    %43 = arith.mulf %42, %26 : vector<16x128xf32>
    %cst_25 = arith.constant dense<0.000000e+00> : vector<128xf32>
    %44 = vector.multi_reduction <add>, %43, %cst_25 [0] : vector<16x128xf32> to vector<128xf32>
    %45 = vector.shape_cast %44 : vector<128xf32> to vector<1x128xf32>
    %c2_26 = arith.constant 2 : index
    %c0_27 = arith.constant 0 : index
    %46 = vector.load %arg3[%c2_26, %c0_27] : memref<4x128xf32, #tpu.memory_space<vmem>>, vector<1x128xf32>
    tpu.vector_store %arg3[%c2_26, %c0_27], %45 {strides = array<i32>} : memref<4x128xf32, #tpu.memory_space<vmem>>, vector<1x128xf32>,
    %47 = arith.addf %40, %42 : vector<16x128xf32>
    %c3 = arith.constant 3 : index
    %c0_28 = arith.constant 0 : index
    %c0_29 = arith.constant 0 : index
    %48 = vector.load %arg1[%c3, %c0_28, %c0_29] : memref<4x16x128xf32, #tpu.memory_space<vmem>>, vector<1x16x128xf32>
    %49 = vector.shape_cast %48 : vector<1x16x128xf32> to vector<16x128xf32>
    %50 = arith.mulf %49, %26 : vector<16x128xf32>
    %cst_30 = arith.constant dense<0.000000e+00> : vector<128xf32>
    %51 = vector.multi_reduction <add>, %50, %cst_30 [0] : vector<16x128xf32> to vector<128xf32>
    %52 = vector.shape_cast %51 : vector<128xf32> to vector<1x128xf32>
    %c3_31 = arith.constant 3 : index
    %c0_32 = arith.constant 0 : index
    %53 = vector.load %arg3[%c3_31, %c0_32] : memref<4x128xf32, #tpu.memory_space<vmem>>, vector<1x128xf32>
    tpu.vector_store %arg3[%c3_31, %c0_32], %52 {strides = array<i32>} : memref<4x128xf32, #tpu.memory_space<vmem>>, vector<1x128xf32>,
    %54 = arith.addf %47, %49 : vector<16x128xf32>
    %cst_33 = arith.constant 2.500000e-01 : f32
    %55 = vector.broadcast %cst_33 : f32 to vector<16x128xf32>
    %56 = arith.mulf %54, %55 : vector<16x128xf32>
    %cst_34 = arith.constant 0.000000e+00 : f32
    %57 = vector.broadcast %cst_34 : f32 to vector<16x128xf32>
    %58 = arith.maximumf %56, %57 : vector<16x128xf32>
    %cst_35 = arith.constant 0.000000e+00 : f32
    %59 = vector.broadcast %cst_35 : f32 to vector<16x128xf32>
    %60 = arith.subf %59, %58 : vector<16x128xf32>
    %61 = arith.mulf %60, %27 : vector<16x128xf32>
    %62 = math.exp %61 : vector<16x128xf32>
    %cst_36 = arith.constant 1.000000e+00 : f32
    %63 = vector.broadcast %cst_36 : f32 to vector<16x128xf32>
    %64 = arith.subf %63, %62 : vector<16x128xf32>
    %c0_37 = arith.constant 0 : index
    %c0_38 = arith.constant 0 : index
    %65 = vector.load %arg4[%c0_37, %c0_38] : memref<16x128xf32, #tpu.memory_space<vmem>>, vector<16x128xf32>
    tpu.vector_store %arg4[%c0_37, %c0_38], %64 {strides = array<i32>} : memref<16x128xf32, #tpu.memory_space<vmem>>, vector<16x128xf32>,
    return
  }
  func.func @transform_0(%arg0: i32) -> (i32, i32, i32) {
    %c0_i32 = arith.constant 0 : i32
    %c0_i32_0 = arith.constant 0 : i32
    %c0_i32_1 = arith.constant 0 : i32
    return %c0_i32, %c0_i32_0, %arg0 : i32, i32, i32
  }
  func.func @transform_1(%arg0: i32) -> (i32, i32, i32) {
    %c0_i32 = arith.constant 0 : i32
    %c0_i32_0 = arith.constant 0 : i32
    %c0_i32_1 = arith.constant 0 : i32
    return %c0_i32, %c0_i32_0, %arg0 : i32, i32, i32
  }
  func.func @transform_2(%arg0: i32) -> (i32, i32) {
    %c0_i32 = arith.constant 0 : i32
    %c0_i32_0 = arith.constant 0 : i32
    return %c0_i32, %arg0 : i32, i32
  }
  func.func @transform_3(%arg0: i32) -> (i32, i32) {
    %c0_i32 = arith.constant 0 : i32
    %c0_i32_0 = arith.constant 0 : i32
    return %c0_i32, %arg0 : i32, i32
  }
}

</mosaic_0001>

<llo_original>
// kernel: tpu_custom_call.1
$region0: #{tpu_custom_call.1}
  #allocation0 [shape = 'u32[]', space=smem, size = 0x4, offset = 0x4, fixed_abs, tag = 'smem constant byte address 0x4 - core index']
  #allocation1 [shape = 'u32[72,128]{1,0:T(1,128)}', space=vmem, size = 0x9000, scoped, tag = 'internal scratch']
  %s0 = inlined_call_operand.hbm [shape: f32[4,16,256], index: 0, kind: input, shape index: {}]
  %s1 = inlined_call_operand.hbm [shape: f32[3,16,256], index: 1, kind: input, shape index: {}]
  %s2 = inlined_call_operand.hbm [shape: f32[4,256], index: 2, kind: output, shape index: {0}]
  %s3 = inlined_call_operand.hbm [shape: f32[16,256], index: 3, kind: output, shape index: {1}]
  %4 = xla_tuple %s2, %s3
  %s5 = sld [smem:[#allocation0]]
  $region57: #{tpu_custom_call.1} parent=0
    _
  %s7 = ssub.s32 1, %s5
  %s8 = scalar_select 0, %s7, %s5
  $region1: #{tpu_custom_call.1} parent=0
    #allocation2 [shape = 'u8[65536]{0}', space=vmem, size = 0x10000, scoped, tag = 'input window, operand 0']
    #allocation3 [shape = 's32[2]{0}', space=sflag, size = 0x8, scoped, tag = 'scoped memory for tpu_custom_call.1']
    #allocation4 [shape = 's32[2]{0}', space=sflag, size = 0x8, scoped, tag = 'scoped memory for tpu_custom_call.1']
    #allocation5 [shape = 'u8[49152]{0}', space=vmem, size = 0xc000, scoped, tag = 'input window, operand 1']
    #allocation6 [shape = 's32[2]{0}', space=sflag, size = 0x8, scoped, tag = 'scoped memory for tpu_custom_call.1']
    #allocation7 [shape = 'u8[4096]{0}', space=vmem, size = 0x1000, scoped, tag = 'output window, operand 0']
    #allocation8 [shape = 'u8[16384]{0}', space=vmem, size = 0x4000, scoped, tag = 'output window, operand 1']
    #allocation9 [shape = 's32[2]{0}', space=sflag, size = 0x8, scoped, tag = 'scoped memory for tpu_custom_call.1']
    %9 = vsyncpa [#allocation3], 0
    %s10 = scalar_lea.sflag [#allocation3], 1
    %11 = vsyncpa %s10, 0
    %12 = vsyncpa [#allocation6], 0
    %s13 = scalar_lea.sflag [#allocation6], 1
    %14 = vsyncpa %s13, 0
    %15 = vsyncpa [#allocation4], 0
    %s16 = scalar_lea.sflag [#allocation4], 1
    %17 = vsyncpa %s16, 0
    %18 = vsyncpa [#allocation9], 0
    %s19 = scalar_lea.sflag [#allocation9], 1
    %20 = vsyncpa %s19, 0
    loop: start=0, step=1, limit=4
    $region2: #{tpu_custom_call.1} parent=1 // loop_pre_header
      _
    $region3: #{tpu_custom_call.1} parent=1 // loop_header
      %s22 = sphi 0, %s26
      %p23 = scmp.ge.s32.totalorder %s22, 4
      %s32 = sphi 0, %s34
      %s35 = sphi 0, %s32
      %s36 = sphi 0, %s35
      %s52 = sphi 0, %s36
      %s58 = sphi 0, %s60
      %s61 = sphi 0, %s58
      %s62 = sphi 0, %s61
      %s78 = sphi 0, %s62
      %s84 = sphi 0, %s86
      %s87 = sphi 0, %s84
      %s88 = sphi 0, %s87
      %s104 = sphi 0, %s88
      %s110 = sphi 0, %s112
      %s113 = sphi 0, %s110
      %s114 = sphi 0, %s113
      %s130 = sphi 0, %s114
    $region4: #{tpu_custom_call.1} parent=1 // loop_header_branch
      %25 = sbr.rel (%p23) target = $region8
    $region5: #{tpu_custom_call.1} parent=1 // loop_body
      %s27 = ssub.s32 %s22, 1
      %s28 = ssub.s32 %s22, 2
      %s29 = sadd.s32 %s22, 1
      %s30 = ssub.s32 %s22, %s29
      %p31 = scmp.eq.s32.totalorder %s30, 0
      %s33 = sadd.s32 %s32, 1
      %s34 = scalar_select %p31, %s32, %s33
      %p37 = pneg %p31
      %p38 = scmp.eq.s32.totalorder %s22, 1
      %p39 = por %p37, %p38
      %p40 = scmp.ne.s32.totalorder %s32, %s35
      %p41 = scmp.eq.s32.totalorder %s22, 0
      %p42 = por %p40, %p41
      %p43 = scmp.ne.s32.totalorder %s32, %s35
      %p44 = scmp.eq.s32.totalorder %s27, 1
      %p45 = por %p43, %p44
      %p46 = scmp.ne.s32.totalorder %s35, %s36
      %p47 = scmp.eq.s32.totalorder %s27, 0
      %p48 = por %p46, %p47
      %p49 = scmp.ne.s32.totalorder %s35, %s36
      %p50 = scmp.eq.s32.totalorder %s28, 1
      %p51 = por %p49, %p50
      %p53 = scmp.ne.s32.totalorder %s36, %s52
      %p54 = scmp.eq.s32.totalorder %s28, 0
      %p55 = por %p53, %p54
      %s56 = ssub.s32 %s22, %s29
      %p57 = scmp.eq.s32.totalorder %s56, 0
      %s59 = sadd.s32 %s58, 1
      %s60 = scalar_select %p57, %s58, %s59
      %p63 = pneg %p57
      %p64 = scmp.eq.s32.totalorder %s22, 1
      %p65 = por %p63, %p64
      %p66 = scmp.ne.s32.totalorder %s58, %s61
      %p67 = scmp.eq.s32.totalorder %s22, 0
      %p68 = por %p66, %p67
      %p69 = scmp.ne.s32.totalorder %s58, %s61
      %p70 = scmp.eq.s32.totalorder %s27, 1
      %p71 = por %p69, %p70
      %p72 = scmp.ne.s32.totalorder %s61, %s62
      %p73 = scmp.eq.s32.totalorder %s27, 0
      %p74 = por %p72, %p73
      %p75 = scmp.ne.s32.totalorder %s61, %s62
      %p76 = scmp.eq.s32.totalorder %s28, 1
      %p77 = por %p75, %p76
      %p79 = scmp.ne.s32.totalorder %s62, %s78
      %p80 = scmp.eq.s32.totalorder %s28, 0
      %p81 = por %p79, %p80
      %s82 = ssub.s32 %s22, %s29
      %p83 = scmp.eq.s32.totalorder %s82, 0
      %s85 = sadd.s32 %s84, 1
      %s86 = scalar_select %p83, %s84, %s85
      %p89 = pneg %p83
      %p90 = scmp.eq.s32.totalorder %s22, 1
      %p91 = por %p89, %p90
      %p92 = scmp.ne.s32.totalorder %s84, %s87
      %p93 = scmp.eq.s32.totalorder %s22, 0
      %p94 = por %p92, %p93
      %p95 = scmp.ne.s32.totalorder %s84, %s87
      %p96 = scmp.eq.s32.totalorder %s27, 1
      %p97 = por %p95, %p96
      %p98 = scmp.ne.s32.totalorder %s87, %s88
      %p99 = scmp.eq.s32.totalorder %s27, 0
      %p100 = por %p98, %p99
      %p101 = scmp.ne.s32.totalorder %s87, %s88
      %p102 = scmp.eq.s32.totalorder %s28, 1
      %p103 = por %p101, %p102
      %p105 = scmp.ne.s32.totalorder %s88, %s104
      %p106 = scmp.eq.s32.totalorder %s28, 0
      %p107 = por %p105, %p106
      %s108 = ssub.s32 %s22, %s29
      %p109 = scmp.eq.s32.totalorder %s108, 0
      %s111 = sadd.s32 %s110, 1
      %s112 = scalar_select %p109, %s110, %s111
      %p115 = pneg %p109
      %p116 = scmp.eq.s32.totalorder %s22, 1
      %p117 = por %p115, %p116
      %p118 = scmp.ne.s32.totalorder %s110, %s113
      %p119 = scmp.eq.s32.totalorder %s22, 0
      %p120 = por %p118, %p119
      %p121 = scmp.ne.s32.totalorder %s110, %s113
      %p122 = scmp.eq.s32.totalorder %s27, 1
      %p123 = por %p121, %p122
      %p124 = scmp.ne.s32.totalorder %s113, %s114
      %p125 = scmp.eq.s32.totalorder %s27, 0
      %p126 = por %p124, %p125
      %p127 = scmp.ne.s32.totalorder %s113, %s114
      %p128 = scmp.eq.s32.totalorder %s28, 1
      %p129 = por %p127, %p128
      %p131 = scmp.ne.s32.totalorder %s114, %s130
      %p132 = scmp.eq.s32.totalorder %s28, 0
      %p133 = por %p131, %p132
      %p134 = scmp.le.s32.totalorder 1, %s22
      %p135 = scmp.lt.s32.totalorder %s22, 3
      %p136 = pnand %p134, %p135
      %p137 = pneg %p136
      // Predicated region
      $region9: #{tpu_custom_call.1} parent=5 // pred_check
        _
      $region10: #{tpu_custom_call.1} parent=5 // pred_check_branch
        %139 = sbr.rel (%p136) target = $region12
      $region11: #{tpu_custom_call.1} parent=5 // pred_region
        %s140 = ssub.s32 %s22, 1
      $region12: #{tpu_custom_call.1} parent=5 // pred_fallthru
        _
      %p141 = scmp.lt.s32.totalorder %s22, 2
      // Predicated region
      $region13: #{tpu_custom_call.1} parent=5 // pred_check
        %p142 = pneg %p141
      $region14: #{tpu_custom_call.1} parent=5 // pred_check_branch
        %144 = sbr.rel (%p142) target = $region16
      $region15: #{tpu_custom_call.1} parent=5 // pred_region
        // Predicated region
        $region17: #{tpu_custom_call.1} parent=15 // pred_check
          %p145 = pneg %p42
        $region18: #{tpu_custom_call.1} parent=15 // pred_check_branch
          %147 = sbr.rel (%p145) target = $region20
        $region19: #{tpu_custom_call.1} parent=15 // pred_region
          %s148 = sand.u32 %s32, 1
          %s149 = scalar_lea.sflag [#allocation3], %s148
          %s150 = sand.u32 %s32, 1
          %s151 = smul.addr %s150, 64
          %s152 = scalar_lea.vmem [#allocation2], %s151
          %154 = vsyncadd %s149, 0
          %s155 = smul.addr %s22, 8
          %s156 = scalar_lea.hbm %s0, %s155
          %s157 = sshll.u32 %s156, 4
          %s158 = int_to_ptr.hbm [resolvable:$true] %s157
          %s159 = sshll.u32 %s152, 4
          %s160 = int_to_ptr.vmem [resolvable:$true] %s159
          %165 = dma.hbm_to_vmem [thread:$0]  %s158, 1024, %s160, %s149, 256, 128, 8
        $region20: #{tpu_custom_call.1} parent=15 // pred_fallthru
          _
        // Predicated region
        $region21: #{tpu_custom_call.1} parent=15 // pred_check
          %p166 = pneg %p68
        $region22: #{tpu_custom_call.1} parent=15 // pred_check_branch
          %168 = sbr.rel (%p166) target = $region24
        $region23: #{tpu_custom_call.1} parent=15 // pred_region
          %s169 = sand.u32 %s58, 1
          %s170 = scalar_lea.sflag [#allocation6], %s169
          %s171 = sand.u32 %s58, 1
          %s172 = smul.addr %s171, 48
          %s173 = scalar_lea.vmem [#allocation5], %s172
          %175 = vsyncadd %s170, 0
          %s176 = smul.addr %s22, 8
          %s177 = scalar_lea.hbm %s1, %s176
          %s178 = sshll.u32 %s177, 4
          %s179 = int_to_ptr.hbm [resolvable:$true] %s178
          %s180 = sshll.u32 %s173, 4
          %s181 = int_to_ptr.vmem [resolvable:$true] %s180
          %186 = dma.hbm_to_vmem [thread:$0]  %s179, 768, %s181, %s170, 256, 128, 8
        $region24: #{tpu_custom_call.1} parent=15 // pred_fallthru
          _
      $region16: #{tpu_custom_call.1} parent=5 // pred_fallthru
        _
      %p187 = scmp.le.s32.totalorder 1, %s22
      %p188 = scmp.lt.s32.totalorder %s22, 3
      %p189 = pnand %p187, %p188
      %p190 = pneg %p189
      // Predicated region
      $region25: #{tpu_custom_call.1} parent=5 // pred_check
        _
      $region26: #{tpu_custom_call.1} parent=5 // pred_check_branch
        %192 = sbr.rel (%p189) target = $region28
      $region27: #{tpu_custom_call.1} parent=5 // pred_region
        %s193 = ssub.s32 %s22, 1
        %s194 = sand.u32 %s35, 1
        %s195 = scalar_lea.sflag [#allocation3], %s194
        %s196 = sand.u32 %s35, 1
        %s197 = smul.addr %s196, 64
        %s198 = scalar_lea.vmem [#allocation2], %s197
        // Predicated region
        $region29: #{tpu_custom_call.1} parent=27 // pred_check
          %p199 = pneg %p48
        $region30: #{tpu_custom_call.1} parent=27 // pred_check_branch
          %201 = sbr.rel (%p199) target = $region32
        $region31: #{tpu_custom_call.1} parent=27 // pred_region
          %203 = dma.done %s195, 1024
        $region32: #{tpu_custom_call.1} parent=27 // pred_fallthru
          _
        %s204 = sand.u32 %s61, 1
        %s205 = scalar_lea.sflag [#allocation6], %s204
        %s206 = sand.u32 %s61, 1
        %s207 = smul.addr %s206, 48
        %s208 = scalar_lea.vmem [#allocation5], %s207
        // Predicated region
        $region33: #{tpu_custom_call.1} parent=27 // pred_check
          %p209 = pneg %p74
        $region34: #{tpu_custom_call.1} parent=27 // pred_check_branch
          %211 = sbr.rel (%p209) target = $region36
        $region35: #{tpu_custom_call.1} parent=27 // pred_region
          %213 = dma.done %s205, 768
        $region36: #{tpu_custom_call.1} parent=27 // pred_fallthru
          _
        %s214 = sand.u32 %s35, 1
        %s215 = scalar_lea.sflag [#allocation3], %s214
        %s216 = sand.u32 %s35, 1
        %s217 = smul.addr %s216, 64
        %s218 = scalar_lea.vmem [#allocation2], %s217
        %p219 = pneg %p48
        %p220 = pneg %p45
        %s221 = sand.u32 %s61, 1
        %s222 = scalar_lea.sflag [#allocation6], %s221
        %s223 = sand.u32 %s61, 1
        %s224 = smul.addr %s223, 48
        %s225 = scalar_lea.vmem [#allocation5], %s224
        %p226 = pneg %p74
        %p227 = pneg %p71
        %p228 = pneg %p100
        %p229 = pneg %p97
        %s230 = sand.u32 %s87, 1
        %s231 = scalar_lea.sflag [#allocation4], %s230
        %s232 = sand.u32 %s87, 1
        %s233 = smul.addr %s232, 4
        %s234 = scalar_lea.vmem [#allocation7], %s233
        %p235 = pneg %p126
        %p236 = pneg %p123
        %s237 = sand.u32 %s113, 1
        %s238 = scalar_lea.sflag [#allocation9], %s237
        %s239 = sand.u32 %s113, 1
        %s240 = smul.addr %s239, 16
        %s241 = scalar_lea.vmem [#allocation8], %s240
        %v242 = vld [vmem:[%s208] sm:$0xff]
        %v243 = vld [vmem:[%s208 + $0x8] sm:$0xff]
        %v244 = vrot.slane %v242, 1
        %v245 = vrot.slane %v243, 1
        %v246 = vlaneseq
        %v247 = vshrl.u32 %v246, 7
        %vm248 = vcmp.lt.s32.totalorder %v247, 7
        %v249 = vsel %vm248, %v244, %v245
        %v250 = vsel %vm248, %v245, %v244
        %v251 = vsub.f32 %v249, %v242
        %v252 = vsub.f32 %v250, %v243
        %v253 = vmul.f32 %v251, %v251
        %v254 = vmul.f32 %v252, %v252
        %s255 = scalar_lea.vmem %s208, 16 [#allocation5]
        %v256 = vld [vmem:[%s255] sm:$0xff]
        %v257 = vld [vmem:[%s255 + $0x8] sm:$0xff]
        %v258 = vrot.slane %v256, 1
        %v259 = vrot.slane %v257, 1
        %v260 = vsel %vm248, %v258, %v259
        %v261 = vsel %vm248, %v259, %v258
        %v262 = vsub.f32 %v260, %v256
        %v263 = vsub.f32 %v261, %v257
        %v264 = vmul.f32 %v262, %v262
        %v265 = vmul.f32 %v263, %v263
        %v266 = vadd.f32 %v253, %v264
        %v267 = vadd.f32 %v254, %v265
        %s268 = scalar_lea.vmem %s208, 32 [#allocation5]
        %v269 = vld [vmem:[%s268] sm:$0xff]
        %v270 = vld [vmem:[%s268 + $0x8] sm:$0xff]
        %v271 = vrot.slane %v269, 1
        %v272 = vrot.slane %v270, 1
        %v273 = vsel %vm248, %v271, %v272
        %v274 = vsel %vm248, %v272, %v271
        %v275 = vsub.f32 %v273, %v269
        %v276 = vsub.f32 %v274, %v270
        %v277 = vmul.f32 %v275, %v275
        %v278 = vmul.f32 %v276, %v276
        %v279 = vadd.f32 %v266, %v277
        %v280 = vadd.f32 %v267, %v278
        %v281 = vrsqrt.pop %v279
        %v282 = vmul.f32 %v281, %v279
        %v283 = vmul.f32 %v282, %v281
        %v284 = vmul.f32 0.5, %v283
        %v285 = vsub.f32 1.5, %v284
        %v286 = vmul.f32 %v281, %v285
        %v287 = vmul.f32 %v279, %v286
        %vm288 = vcmp.eq.f32.partialorder %v279, inf
        %v289 = vsel %vm288, %v279, %v287
        %vm290 = vcmp.eq.f32.partialorder %v279, 0.0
        %v291 = vand.u32 %v279, 2147483648
        %v292 = vsel %vm290, %v291, %v289
        %v293 = vrsqrt.pop %v280
        %v294 = vmul.f32 %v293, %v280
        %v295 = vmul.f32 %v294, %v293
        %v296 = vmul.f32 0.5, %v295
        %v297 = vsub.f32 1.5, %v296
        %v298 = vmul.f32 %v293, %v297
        %v299 = vmul.f32 %v280, %v298
        %vm300 = vcmp.eq.f32.partialorder %v280, inf
        %v301 = vsel %vm300, %v280, %v299
        %vm302 = vcmp.eq.f32.partialorder %v280, 0.0
        %v303 = vand.u32 %v280, 2147483648
        %v304 = vsel %vm302, %v303, %v301
        %v305 = vadd.s32 %v247, 8
        %vm306 = vcmp.lt.s32.totalorder %v247, 15
        %vm307 = vcmp.lt.s32.totalorder %v305, 15
        %v308 = vsel %vm306, %v292, 0.0
        %v309 = vsel %vm307, %v304, 0.0
        %v310 = vrot.slane %v308, 7
        %v311 = vrot.slane %v309, 7
        %vm312 = vcmp.lt.s32.totalorder %v247, 1
        %v313 = vsel %vm312, %v310, %v311
        %v314 = vsel %vm312, %v311, %v310
        %v315 = vadd.f32 %v308, %v314
        %v316 = vadd.f32 %v309, %v313
        %v317 = vmul.f32 %v315, 0.5
        %v318 = vmul.f32 %v316, 0.5
        %v319 = vsel %vm306, %v292, %v314
        %v320 = vsel %vm307, %v304, %v313
        %v321 = vld [vmem:[%s198] sm:$0xff]
        %v322 = vld [vmem:[%s198 + $0x8] sm:$0xff]
        %v323 = vmul.f32 %v321, %v317
        %v324 = vmul.f32 %v322, %v318
        %v325 = vadd.f32 %v323, %v324
        %v326 = vrot.slane %v325, 4
        %v327 = vadd.f32 %v325, %v326
        %v328 = vrot.slane %v327, 2
        %v329 = vadd.f32 %v327, %v328
        %v330 = vrot.slane %v329, 1
        %v331 = vadd.f32 %v329, %v330
        %332 = vst [vmem:[%s234] sm:$0x1] %v331
        %s333 = scalar_lea.vmem %s198, 16 [#allocation2]
        %v334 = vld [vmem:[%s333] sm:$0xff]
        %v335 = vld [vmem:[%s333 + $0x8] sm:$0xff]
        %v336 = vmul.f32 %v334, %v317
        %v337 = vmul.f32 %v335, %v318
        %v338 = vadd.f32 %v336, %v337
        %v339 = vrot.slane %v338, 4
        %v340 = vadd.f32 %v338, %v339
        %v341 = vrot.slane %v340, 2
        %v342 = vadd.f32 %v340, %v341
        %v343 = vrot.slane %v342, 1
        %v344 = vadd.f32 %v342, %v343
        %345 = vst [vmem:[%s234 + $0x1] sm:$0x1] %v344
        %v346 = vadd.f32 %v321, %v334
        %v347 = vadd.f32 %v322, %v335
        %s348 = scalar_lea.vmem %s198, 32 [#allocation2]
        %v349 = vld [vmem:[%s348] sm:$0xff]
        %v350 = vld [vmem:[%s348 + $0x8] sm:$0xff]
        %v351 = vmul.f32 %v349, %v317
        %v352 = vmul.f32 %v350, %v318
        %v353 = vadd.f32 %v351, %v352
        %v354 = vrot.slane %v353, 4
        %v355 = vadd.f32 %v353, %v354
        %v356 = vrot.slane %v355, 2
        %v357 = vadd.f32 %v355, %v356
        %v358 = vrot.slane %v357, 1
        %v359 = vadd.f32 %v357, %v358
        %360 = vst [vmem:[%s234 + $0x2] sm:$0x1] %v359
        %v361 = vadd.f32 %v346, %v349
        %v362 = vadd.f32 %v347, %v350
        %s363 = scalar_lea.vmem %s198, 48 [#allocation2]
        %v364 = vld [vmem:[%s363] sm:$0xff]
        %v365 = vld [vmem:[%s363 + $0x8] sm:$0xff]
        %v366 = vmul.f32 %v364, %v317
        %v367 = vmul.f32 %v365, %v318
        %v368 = vadd.f32 %v366, %v367
        %v369 = vrot.slane %v368, 4
        %v370 = vadd.f32 %v368, %v369
        %v371 = vrot.slane %v370, 2
        %v372 = vadd.f32 %v370, %v371
        %v373 = vrot.slane %v372, 1
        %v374 = vadd.f32 %v372, %v373
        %375 = vst [vmem:[%s234 + $0x3] sm:$0x1] %v374
        %v376 = vadd.f32 %v361, %v364
        %v377 = vadd.f32 %v362, %v365
        %v378 = vmul.f32 %v376, 0.25
        %v379 = vmul.f32 %v377, 0.25
        %v380 = vmax.f32 %v378, 0.0
        %v381 = vmax.f32 %v379, 0.0
        %v382 = vsub.f32 0.0, %v380
        %v383 = vsub.f32 0.0, %v381
        %v384 = vmul.f32 %v382, %v319
        %v385 = vmul.f32 %v383, %v320
        %v386 = vmul.f32 %v384, 1.442695
        %v387 = vpow.pop %v386
        %v388 = vmul.f32 %v385, 1.442695
        %v389 = vpow.pop %v388
        %v390 = vsub.f32 1.0, %v387
        %v391 = vsub.f32 1.0, %v389
        %392 = vst [vmem:[%s241] sm:$0xff] %v390
        %393 = vst [vmem:[%s241 + $0x8] sm:$0xff] %v391
        %s394 = sand.u32 %s87, 1
        %s395 = scalar_lea.sflag [#allocation4], %s394
        %s396 = sand.u32 %s87, 1
        %s397 = smul.addr %s396, 4
        %s398 = scalar_lea.vmem [#allocation7], %s397
        %s399 = sand.u32 %s113, 1
        %s400 = scalar_lea.sflag [#allocation9], %s399
        %s401 = sand.u32 %s113, 1
        %s402 = smul.addr %s401, 16
        %s403 = scalar_lea.vmem [#allocation8], %s402
        // Predicated region
        $region37: #{tpu_custom_call.1} parent=27 // pred_check
          %p404 = pneg %p97
        $region38: #{tpu_custom_call.1} parent=27 // pred_check_branch
          %406 = sbr.rel (%p404) target = $region40
        $region39: #{tpu_custom_call.1} parent=27 // pred_region
          %408 = vsyncadd %s395, 0
          %s409 = smul.addr %s27, 4
          %s410 = scalar_lea.hbm %s2, %s409
          %s412 = sshll.u32 %s398, 4
          %s413 = int_to_ptr.vmem [resolvable:$true] %s412
          %s414 = sshll.u32 %s410, 4
          %s415 = int_to_ptr.hbm [resolvable:$true] %s414
          %417 = dma.vmem_to_hbm [thread:$0]  %s413, 64, %s415, %s395
        $region40: #{tpu_custom_call.1} parent=27 // pred_fallthru
          _
        // Predicated region
        $region41: #{tpu_custom_call.1} parent=27 // pred_check
          %p418 = pneg %p123
        $region42: #{tpu_custom_call.1} parent=27 // pred_check_branch
          %420 = sbr.rel (%p418) target = $region44
        $region43: #{tpu_custom_call.1} parent=27 // pred_region
          %422 = vsyncadd %s400, 0
          %s423 = smul.addr %s27, 8
          %s424 = scalar_lea.hbm %s3, %s423
          %s425 = sshll.u32 %s403, 4
          %s426 = int_to_ptr.vmem [resolvable:$true] %s425
          %s427 = sshll.u32 %s424, 4
          %s428 = int_to_ptr.hbm [resolvable:$true] %s427
          %433 = dma.vmem_to_hbm [thread:$0]  %s426, 256, %s428, %s400, 128, 256, 8
        $region44: #{tpu_custom_call.1} parent=27 // pred_fallthru
          _
      $region28: #{tpu_custom_call.1} parent=5 // pred_fallthru
        _
      %p434 = scmp.le.s32.totalorder 2, %s22
      // Predicated region
      $region45: #{tpu_custom_call.1} parent=5 // pred_check
        %p435 = pneg %p434
      $region46: #{tpu_custom_call.1} parent=5 // pred_check_branch
        %437 = sbr.rel (%p435) target = $region48
      $region47: #{tpu_custom_call.1} parent=5 // pred_region
        %s438 = ssub.s32 %s22, 2
        // Predicated region
        $region49: #{tpu_custom_call.1} parent=47 // pred_check
          %p439 = pneg %p103
        $region50: #{tpu_custom_call.1} parent=47 // pred_check_branch
          %441 = sbr.rel (%p439) target = $region52
        $region51: #{tpu_custom_call.1} parent=47 // pred_region
          %s442 = sand.u32 %s88, 1
          %s443 = scalar_lea.sflag [#allocation4], %s442
          %s444 = sand.u32 %s88, 1
          %s445 = smul.addr %s444, 4
          %s446 = scalar_lea.vmem [#allocation7], %s445
          %448 = dma.done %s443, 64
        $region52: #{tpu_custom_call.1} parent=47 // pred_fallthru
          _
        // Predicated region
        $region53: #{tpu_custom_call.1} parent=47 // pred_check
          %p449 = pneg %p129
        $region54: #{tpu_custom_call.1} parent=47 // pred_check_branch
          %451 = sbr.rel (%p449) target = $region56
        $region55: #{tpu_custom_call.1} parent=47 // pred_region
          %s452 = sand.u32 %s114, 1
          %s453 = scalar_lea.sflag [#allocation9], %s452
          %s454 = sand.u32 %s114, 1
          %s455 = smul.addr %s454, 16
          %s456 = scalar_lea.vmem [#allocation8], %s455
          %458 = dma.done %s453, 256
        $region56: #{tpu_custom_call.1} parent=47 // pred_fallthru
          _
      $region48: #{tpu_custom_call.1} parent=5 // pred_fallthru
        _
    $region6: #{tpu_custom_call.1} parent=1 // loop_footer
      %s26 = sadd.s32 1, %s22
    $region7: #{tpu_custom_call.1} parent=1 // loop_footer_branch
      %21 = sbr.rel target = $region3
    $region8: #{tpu_custom_call.1} parent=1 // loop_exit
      _
    %459 = vsyncpa [#allocation3], 1
    %s460 = scalar_lea.sflag [#allocation3], 1
    %461 = vsyncpa %s460, 1
    %462 = vsyncpa [#allocation6], 1
    %s463 = scalar_lea.sflag [#allocation6], 1
    %464 = vsyncpa %s463, 1
    %465 = vsyncpa [#allocation4], 1
    %s466 = scalar_lea.sflag [#allocation4], 1
    %467 = vsyncpa %s466, 1
    %468 = vsyncpa [#allocation9], 1
    %s469 = scalar_lea.sflag [#allocation9], 1
    %470 = vsyncpa %s469, 1

</llo_original>
